<compile_context>
chip_gen: v6e
topology: v6e:2x2x1
jax: 0.10.0
libtpu: 0.0.40
codegen_flags: <defaults>
</compile_context>

<pallas_src>
import functools
import jax
import jax.numpy as jnp
from jax.experimental import pallas as pl
from jax.experimental.pallas import tpu as pltpu

NEG_SLOPE = 0.2


def _resnet_block_kernel(xp_ref, halo_ref, w1_ref, b1_ref, w2_ref, b2_ref,
                         ws_ref, bs_ref, o_ref, *, TL, C, d, fuse_taps):
    # xp_ref  : (1, TL, C)     rows [i*TL, i*TL+TL)       of the padded input
    # halo_ref: (1, 1, 2d, C)  rows [i*TL+TL, i*TL+TL+2d) of the padded input
    # w1_ref  : (3C, C)  bf16, stacked along Cin, tap-major  [k*C + cin, cout]
    # w2_ref/ws_ref: (C, C) bf16 [cin, cout];  b*_ref: (1, C) f32
    xp = xp_ref[0]                                    # (TL, C)
    hl = halo_ref[0, 0]                               # (2d, C)
    win = jnp.concatenate([xp, hl], axis=0)           # (TL + 2d, C)

    # Shortcut input = raw (pre-activation) x rows of this tile.
    x_raw = win[d:d + TL, :]                          # (TL, C)

    # LeakyReLU(0.2) commutes with reflection padding (pointwise).
    # Elementwise math in f32; cast only the MXU operands to bf16.
    h = jnp.where(win > 0, win, NEG_SLOPE * win)
    hb = h.astype(w1_ref.dtype)

    if fuse_taps:
        # C <= 128: fuse the 3 dilated taps -> one matmul with contraction 3C.
        h3 = jnp.concatenate(
            [hb[k * d:k * d + TL, :] for k in range(3)], axis=1)   # (TL, 3C)
        y = jnp.dot(h3, w1_ref[...],
                    preferred_element_type=jnp.float32) + b1_ref[...]
    else:
        # Large C: three shifted matmuls; accumulator starts at the bias.
        acc = jnp.broadcast_to(b1_ref[...], (TL, C)).astype(jnp.float32)
        for k in range(3):
            acc = acc + jnp.dot(hb[k * d:k * d + TL, :],
                                w1_ref[k * C:(k + 1) * C, :],
                                preferred_element_type=jnp.float32)
        y = acc

    # LeakyReLU(0.2) then k=1 conv.
    y = jnp.where(y > 0, y, NEG_SLOPE * y)
    y = jnp.dot(y.astype(w2_ref.dtype), w2_ref[...],
                preferred_element_type=jnp.float32) + b2_ref[...]

    # Shortcut k=1 conv on the raw input.
    s = jnp.dot(x_raw.astype(ws_ref.dtype), ws_ref[...],
                preferred_element_type=jnp.float32) + bs_ref[...]

    o_ref[0] = (s + y).astype(o_ref.dtype)


def _choose_tile_l(L, C):
    """Pick the L-tile: big enough to amortize per-grid-step overhead (>=512
    rows where possible), small enough that ~40 B/row/channel of live VMEM
    (double-buffered f32 I/O blocks + intermediates) stays well under v7x's
    64 MiB."""
    budget = 40 * 1024 * 1024
    tl = 1024
    while tl > 256 and 40 * tl * C > budget:
        tl //= 2
    return tl


def resnet_block_pallas(x_blc, w1, b1, w2, b2, ws, bs, dilation, *, tile_l=None):
    """x_blc: (B, L, C) float32.  Weights in PyTorch layout (Cout, Cin, K)."""
    B, L, C = x_blc.shape
    d = int(dilation)

    # ---- L tiling ----
    if tile_l is None:
        tile_l = _choose_tile_l(L, C)
    TL = min(int(tile_l), L)
    if TL < L:
        TL = max(8, (TL // 8) * 8)          # keep a (8,*)-aligned block
    nt = -(-L // TL)
    Lt = nt * TL

    # ---- reflection pad (+ zero tail so nt*TL tiles stay in-bounds) ----
    x_pad = jnp.pad(x_blc, ((0, 0), (d, d), (0, 0)), mode="reflect")
    if Lt > L:
        x_pad = jnp.pad(x_pad, ((0, 0), (0, Lt - L), (0, 0)))      # (B, Lt+2d, C)

    # halo[b, i] = x_pad[b, (i+1)*TL : (i+1)*TL + 2d]  (the 2d-row tail of
    # tile i's conv window).  Tiny: (2d/TL) of the activation bytes.
    idx = (jnp.arange(nt)[:, None] + 1) * TL + jnp.arange(2 * d)[None, :]
    halo = jnp.take(x_pad, idx, axis=1)                            # (B, nt, 2d, C)

    # ---- weights -> (Cin, Cout), bf16 for the MXU; biases stay f32 ----
    w1_s = jnp.transpose(w1, (2, 1, 0)).reshape(3 * C, C).astype(jnp.bfloat16)
    w2_t = jnp.transpose(w2[:, :, 0]).astype(jnp.bfloat16)
    ws_t = jnp.transpose(ws[:, :, 0]).astype(jnp.bfloat16)
    b1_r = b1.reshape(1, C).astype(jnp.float32)
    b2_r = b2.reshape(1, C).astype(jnp.float32)
    bs_r = bs.reshape(1, C).astype(jnp.float32)

    kernel = functools.partial(_resnet_block_kernel, TL=TL, C=C, d=d,
                               fuse_taps=(C <= 128))

    # Raise the scoped-VMEM limit only when the tile actually needs it.
    est_bytes = 40 * TL * C + 12 * C * C
    vmem_limit = (48 * 1024 * 1024) if est_bytes > (16 << 20) else None

    weight_kw = dict(pipeline_mode=pl.Buffered(1))   # constant index map

    out = pl.pallas_call(
        kernel,
        out_shape=jax.ShapeDtypeStruct((B, Lt, C), x_blc.dtype),
        grid_spec=pltpu.PrefetchScalarGridSpec(
            num_scalar_prefetch=0,
            grid=(B, nt),
            in_specs=[
                pl.BlockSpec((1, TL, C), lambda b, i: (b, i, 0)),        # body
                pl.BlockSpec((1, 1, 2 * d, C), lambda b, i: (b, i, 0, 0)),  # halo
                pl.BlockSpec((3 * C, C), lambda b, i: (0, 0), **weight_kw),  # w1
                pl.BlockSpec((1, C), lambda b, i: (0, 0), **weight_kw),      # b1
                pl.BlockSpec((C, C), lambda b, i: (0, 0), **weight_kw),      # w2
                pl.BlockSpec((1, C), lambda b, i: (0, 0), **weight_kw),      # b2
                pl.BlockSpec((C, C), lambda b, i: (0, 0), **weight_kw),      # ws
                pl.BlockSpec((1, C), lambda b, i: (0, 0), **weight_kw),      # bs
            ],
            out_specs=pl.BlockSpec((1, TL, C), lambda b, i: (b, i, 0)),
        ),
        compiler_params=pltpu.CompilerParams(
            dimension_semantics=("parallel", "parallel"),
            vmem_limit_bytes=vmem_limit),
    )(x_pad, halo, w1_s, b1_r, w2_t, b2_r, ws_t, bs_r)

    return out[:, :L, :]


def weight_norm(v, g):
    """PyTorch weight_norm(dim=0): w[o] = g[o] * v[o] / ||v[o]||."""
    norm = jnp.sqrt(jnp.sum(v * v, axis=(1, 2), keepdims=True))
    return g.reshape(-1, 1, 1) * v / norm


def leaky(x):
    return jnp.where(x > 0, x, NEG_SLOPE * x)


def reference_forward(x_ncl, w1, b1, w2, b2, ws, bs, d):
    """Pure-JAX (f32) reference matching the PyTorch module (NCL layout)."""
    dn = ("NCH", "OIH", "NCH")
    h = leaky(x_ncl)
    h = jnp.pad(h, ((0, 0), (0, 0), (d, d)), mode="reflect")
    y = jax.lax.conv_general_dilated(h, w1, (1,), "VALID", rhs_dilation=(d,),
                                     dimension_numbers=dn) + b1[None, :, None]
    y = leaky(y)
    y = jax.lax.conv_general_dilated(y, w2, (1,), "VALID",
                                     dimension_numbers=dn) + b2[None, :, None]
    s = jax.lax.conv_general_dilated(x_ncl, ws, (1,), "VALID",
                                     dimension_numbers=dn) + bs[None, :, None]
    return s + y


if __name__ == "__main__":
    B, C, L = 2, 8, 16       # batch, dim (channels), sequence length
    dilation = 2

    key = jax.random.PRNGKey(0)
    ks = jax.random.split(key, 11)

    # Synthetic weight-norm parameters (v, g) + biases,
    # PyTorch Conv1d weight layout: (C_out, C_in, K).
    v1 = jax.random.normal(ks[0], (C, C, 3), jnp.float32) * 0.2
    g1 = jax.random.uniform(ks[1], (C,), jnp.float32, 0.5, 1.5)
    b1 = jax.random.normal(ks[2], (C,), jnp.float32) * 0.1
    v2 = jax.random.normal(ks[3], (C, C, 1), jnp.float32) * 0.2
    g2 = jax.random.uniform(ks[4], (C,), jnp.float32, 0.5, 1.5)
    b2 = jax.random.normal(ks[5], (C,), jnp.float32) * 0.1
    vs = jax.random.normal(ks[6], (C, C, 1), jnp.float32) * 0.2
    gs = jax.random.uniform(ks[7], (C,), jnp.float32, 0.5, 1.5)
    bs = jax.random.normal(ks[8], (C,), jnp.float32) * 0.1

    w1 = weight_norm(v1, g1)
    w2 = weight_norm(v2, g2)
    ws = weight_norm(vs, gs)

    # bf16 MXU operands (f32 accumulation) -> relaxed tolerance vs f32 ref.
    ATOL = RTOL = 5e-2

    # ---- test 1: single-tile path (TL == L) ----
    x_ncl = jax.random.normal(ks[9], (B, C, L), jnp.float32)
    x_blc = jnp.transpose(x_ncl, (0, 2, 1))
    out_blc = resnet_block_pallas(x_blc, w1, b1, w2, b2, ws, bs, dilation)
    out_blc = jax.block_until_ready(out_blc)
    out_ncl = jnp.transpose(out_blc, (0, 2, 1))
    ref = reference_forward(x_ncl, w1, b1, w2, b2, ws, bs, dilation)
    assert out_ncl.shape == ref.shape == (B, C, L)
    assert jnp.allclose(out_ncl, ref, atol=ATOL, rtol=RTOL), (
        float(jnp.max(jnp.abs(out_ncl - ref))))

    # ---- test 2: multi-tile + halo path (ragged L, forced small tile) ----
    L2 = 20
    x2_ncl = jax.random.normal(ks[10], (B, C, L2), jnp.float32)
    x2_blc = jnp.transpose(x2_ncl, (0, 2, 1))
    out2_blc = resnet_block_pallas(x2_blc, w1, b1, w2, b2, ws, bs, dilation,
                                   tile_l=8)
    out2_blc = jax.block_until_ready(out2_blc)
    out2_ncl = jnp.transpose(out2_blc, (0, 2, 1))
    ref2 = reference_forward(x2_ncl, w1, b1, w2, b2, ws, bs, dilation)
    assert out2_ncl.shape == ref2.shape == (B, C, L2)
    assert jnp.allclose(out2_ncl, ref2, atol=ATOL, rtol=RTOL), (
        float(jnp.max(jnp.abs(out2_ncl - ref2))))

    print("KERNEL_OK")
</pallas_src>

<mosaic_0001>
module attributes {stable_mosaic.version = 11 : i64} {
  func.func @_resnet_block_kernel(%arg0: i32, %arg1: i32, %arg2: memref<1x16x8xf32, #tpu.memory_space<vmem>>, %arg3: memref<1x1x4x8xf32, #tpu.memory_space<vmem>>, %arg4: memref<24x8xbf16, #tpu.memory_space<vmem>>, %arg5: memref<1x8xf32, #tpu.memory_space<vmem>>, %arg6: memref<8x8xbf16, #tpu.memory_space<vmem>>, %arg7: memref<1x8xf32, #tpu.memory_space<vmem>>, %arg8: memref<8x8xbf16, #tpu.memory_space<vmem>>, %arg9: memref<1x8xf32, #tpu.memory_space<vmem>>, %arg10: memref<1x16x8xf32, #tpu.memory_space<vmem>>) attributes {dimension_semantics = [#tpu.dimension_semantics<parallel>, #tpu.dimension_semantics<parallel>], iteration_bounds = array<i64: 2, 1>, scalar_prefetch = 0 : i64, scratch_operands = 0 : i64, tpu.core_type = #tpu.core_type<tc>, window_params = [{transform_indices = @transform_0, window_bounds = array<i64: 1, 16, 8>}, {transform_indices = @transform_1, window_bounds = array<i64: 1, 1, 4, 8>}, {pipeline_mode = #tpu.pipeline_mode<synchronous>, transform_indices = @transform_2, window_bounds = array<i64: 24, 8>}, {pipeline_mode = #tpu.pipeline_mode<synchronous>, transform_indices = @transform_3, window_bounds = array<i64: 1, 8>}, {pipeline_mode = #tpu.pipeline_mode<synchronous>, transform_indices = @transform_4, window_bounds = array<i64: 8, 8>}, {pipeline_mode = #tpu.pipeline_mode<synchronous>, transform_indices = @transform_5, window_bounds = array<i64: 1, 8>}, {pipeline_mode = #tpu.pipeline_mode<synchronous>, transform_indices = @transform_6, window_bounds = array<i64: 8, 8>}, {pipeline_mode = #tpu.pipeline_mode<synchronous>, transform_indices = @transform_7, window_bounds = array<i64: 1, 8>}, {transform_indices = @transform_8, window_bounds = array<i64: 1, 16, 8>}]} {
    %c0 = arith.constant 0 : index
    %c0_0 = arith.constant 0 : index
    %c0_1 = arith.constant 0 : index
    %0 = vector.load %arg2[%c0, %c0_0, %c0_1] : memref<1x16x8xf32, #tpu.memory_space<vmem>>, vector<1x16x8xf32>
    %1 = vector.shape_cast %0 : vector<1x16x8xf32> to vector<16x8xf32>
    %c0_2 = arith.constant 0 : index
    %c0_3 = arith.constant 0 : index
    %c0_4 = arith.constant 0 : index
    %c0_5 = arith.constant 0 : index
    %2 = vector.load %arg3[%c0_2, %c0_3, %c0_4, %c0_5] : memref<1x1x4x8xf32, #tpu.memory_space<vmem>>, vector<1x1x4x8xf32>
    %3 = vector.shape_cast %2 : vector<1x1x4x8xf32> to vector<4x8xf32>
    %4 = tpu.concatenate %1, %3 in 0 : vector<16x8xf32>, vector<4x8xf32> -> vector<20x8xf32>
    %5 = vector.extract_strided_slice %4 {offsets = [2, 0], sizes = [16, 8], strides = [1, 1]} : vector<20x8xf32> to vector<16x8xf32>
    %cst = arith.constant 0.000000e+00 : f32
    %6 = vector.broadcast %cst : f32 to vector<20x8xf32>
    %7 = arith.cmpf ogt, %4, %6 : vector<20x8xf32>
    %cst_6 = arith.constant 2.000000e-01 : f32
    %8 = vector.broadcast %cst_6 : f32 to vector<20x8xf32>
    %9 = arith.mulf %8, %4 : vector<20x8xf32>
    %10 = arith.select %7, %4, %9 : vector<20x8xi1>, vector<20x8xf32>
    %11 = arith.truncf %10 : vector<20x8xf32> to vector<20x8xbf16>
    %12 = vector.extract_strided_slice %11 {offsets = [0, 0], sizes = [16, 8], strides = [1, 1]} : vector<20x8xbf16> to vector<16x8xbf16>
    %13 = vector.extract_strided_slice %11 {offsets = [2, 0], sizes = [16, 8], strides = [1, 1]} : vector<20x8xbf16> to vector<16x8xbf16>
    %14 = vector.extract_strided_slice %11 {offsets = [4, 0], sizes = [16, 8], strides = [1, 1]} : vector<20x8xbf16> to vector<16x8xbf16>
    %15 = tpu.concatenate %12, %13, %14 in 1 : vector<16x8xbf16>, vector<16x8xbf16>, vector<16x8xbf16> -> vector<16x24xbf16>
    %c0_7 = arith.constant 0 : index
    %c0_8 = arith.constant 0 : index
    %16 = vector.load %arg4[%c0_7, %c0_8] : memref<24x8xbf16, #tpu.memory_space<vmem>>, vector<24x8xbf16>
    %cst_9 = arith.constant dense<0.000000e+00> : vector<16x8xf32>
    %17 = tpu.matmul %15, %16, %cst_9 {dimension_numbers = #tpu.dot_dimension_numbers<[1], [0], [0], [1], [0, 0, 1, 1], [], []>} : vector<16x24xbf16>, vector<24x8xbf16>, vector<16x8xf32> -> vector<16x8xf32>
    %c0_10 = arith.constant 0 : index
    %c0_11 = arith.constant 0 : index
    %18 = vector.load %arg5[%c0_10, %c0_11] : memref<1x8xf32, #tpu.memory_space<vmem>>, vector<1x8xf32>
    %19 = vector.broadcast %18 : vector<1x8xf32> to vector<16x8xf32>
    %20 = arith.addf %17, %19 : vector<16x8xf32>
    %cst_12 = arith.constant 0.000000e+00 : f32
    %21 = vector.broadcast %cst_12 : f32 to vector<16x8xf32>
    %22 = arith.cmpf ogt, %20, %21 : vector<16x8xf32>
    %cst_13 = arith.constant 2.000000e-01 : f32
    %23 = vector.broadcast %cst_13 : f32 to vector<16x8xf32>
    %24 = arith.mulf %23, %20 : vector<16x8xf32>
    %25 = arith.select %22, %20, %24 : vector<16x8xi1>, vector<16x8xf32>
    %26 = arith.truncf %25 : vector<16x8xf32> to vector<16x8xbf16>
    %c0_14 = arith.constant 0 : index
    %c0_15 = arith.constant 0 : index
    %27 = vector.load %arg6[%c0_14, %c0_15] : memref<8x8xbf16, #tpu.memory_space<vmem>>, vector<8x8xbf16>
    %cst_16 = arith.constant dense<0.000000e+00> : vector<16x8xf32>
    %28 = tpu.matmul %26, %27, %cst_16 {dimension_numbers = #tpu.dot_dimension_numbers<[1], [0], [0], [1], [0, 0, 1, 1], [], []>} : vector<16x8xbf16>, vector<8x8xbf16>, vector<16x8xf32> -> vector<16x8xf32>
    %c0_17 = arith.constant 0 : index
    %c0_18 = arith.constant 0 : index
    %29 = vector.load %arg7[%c0_17, %c0_18] : memref<1x8xf32, #tpu.memory_space<vmem>>, vector<1x8xf32>
    %30 = vector.broadcast %29 : vector<1x8xf32> to vector<16x8xf32>
    %31 = arith.addf %28, %30 : vector<16x8xf32>
    %32 = arith.truncf %5 : vector<16x8xf32> to vector<16x8xbf16>
    %c0_19 = arith.constant 0 : index
    %c0_20 = arith.constant 0 : index
    %33 = vector.load %arg8[%c0_19, %c0_20] : memref<8x8xbf16, #tpu.memory_space<vmem>>, vector<8x8xbf16>
    %cst_21 = arith.constant dense<0.000000e+00> : vector<16x8xf32>
    %34 = tpu.matmul %32, %33, %cst_21 {dimension_numbers = #tpu.dot_dimension_numbers<[1], [0], [0], [1], [0, 0, 1, 1], [], []>} : vector<16x8xbf16>, vector<8x8xbf16>, vector<16x8xf32> -> vector<16x8xf32>
    %c0_22 = arith.constant 0 : index
    %c0_23 = arith.constant 0 : index
    %35 = vector.load %arg9[%c0_22, %c0_23] : memref<1x8xf32, #tpu.memory_space<vmem>>, vector<1x8xf32>
    %36 = vector.broadcast %35 : vector<1x8xf32> to vector<16x8xf32>
    %37 = arith.addf %34, %36 : vector<16x8xf32>
    %38 = arith.addf %37, %31 : vector<16x8xf32>
    %c0_24 = arith.constant 0 : index
    %c0_25 = arith.constant 0 : index
    %c0_26 = arith.constant 0 : index
    %39 = vector.load %arg10[%c0_24, %c0_25, %c0_26] : memref<1x16x8xf32, #tpu.memory_space<vmem>>, vector<1x16x8xf32>
    %40 = vector.shape_cast %39 : vector<1x16x8xf32> to vector<16x8xf32>
    %41 = vector.shape_cast %38 : vector<16x8xf32> to vector<1x16x8xf32>
    tpu.vector_store %arg10[%c0_24, %c0_25, %c0_26], %41 {strides = array<i32>} : memref<1x16x8xf32, #tpu.memory_space<vmem>>, vector<1x16x8xf32>,
    return
  }
  func.func @transform_0(%arg0: i32, %arg1: i32) -> (i32, i32, i32) {
    %c0_i32 = arith.constant 0 : i32
    %c0_i32_0 = arith.constant 0 : i32
    return %arg0, %arg1, %c0_i32 : i32, i32, i32
  }
  func.func @transform_1(%arg0: i32, %arg1: i32) -> (i32, i32, i32, i32) {
    %c0_i32 = arith.constant 0 : i32
    %c0_i32_0 = arith.constant 0 : i32
    %c0_i32_1 = arith.constant 0 : i32
    return %arg0, %arg1, %c0_i32, %c0_i32_0 : i32, i32, i32, i32
  }
  func.func @transform_2(%arg0: i32, %arg1: i32) -> (i32, i32) {
    %c0_i32 = arith.constant 0 : i32
    %c0_i32_0 = arith.constant 0 : i32
    %c0_i32_1 = arith.constant 0 : i32
    return %c0_i32, %c0_i32_0 : i32, i32
  }
  func.func @transform_3(%arg0: i32, %arg1: i32) -> (i32, i32) {
    %c0_i32 = arith.constant 0 : i32
    %c0_i32_0 = arith.constant 0 : i32
    %c0_i32_1 = arith.constant 0 : i32
    return %c0_i32, %c0_i32_0 : i32, i32
  }
  func.func @transform_4(%arg0: i32, %arg1: i32) -> (i32, i32) {
    %c0_i32 = arith.constant 0 : i32
    %c0_i32_0 = arith.constant 0 : i32
    %c0_i32_1 = arith.constant 0 : i32
    return %c0_i32, %c0_i32_0 : i32, i32
  }
  func.func @transform_5(%arg0: i32, %arg1: i32) -> (i32, i32) {
    %c0_i32 = arith.constant 0 : i32
    %c0_i32_0 = arith.constant 0 : i32
    %c0_i32_1 = arith.constant 0 : i32
    return %c0_i32, %c0_i32_0 : i32, i32
  }
  func.func @transform_6(%arg0: i32, %arg1: i32) -> (i32, i32) {
    %c0_i32 = arith.constant 0 : i32
    %c0_i32_0 = arith.constant 0 : i32
    %c0_i32_1 = arith.constant 0 : i32
    return %c0_i32, %c0_i32_0 : i32, i32
  }
  func.func @transform_7(%arg0: i32, %arg1: i32) -> (i32, i32) {
    %c0_i32 = arith.constant 0 : i32
    %c0_i32_0 = arith.constant 0 : i32
    %c0_i32_1 = arith.constant 0 : i32
    return %c0_i32, %c0_i32_0 : i32, i32
  }
  func.func @transform_8(%arg0: i32, %arg1: i32) -> (i32, i32, i32) {
    %c0_i32 = arith.constant 0 : i32
    %c0_i32_0 = arith.constant 0 : i32
    return %arg0, %arg1, %c0_i32 : i32, i32, i32
  }
}

</mosaic_0001>

<llo_original>
// kernel: tpu_custom_call.1
$region0: #{tpu_custom_call.1}
  #allocation0 [shape = 'u32[]', space=smem, size = 0x4, offset = 0x4, fixed_abs, tag = 'smem constant byte address 0x4 - core index']
  #allocation1 [shape = 'u32[144,128]{1,0:T(1,128)}', space=vmem, size = 0x12000, scoped, tag = 'internal scratch']
  %s0 = inlined_call_operand.vmem [shape: f32[2,20,8], index: 0, kind: input, shape index: {}]
  %s1 = inlined_call_operand.vmem [shape: f32[2,1,4,8], index: 1, kind: input, shape index: {}]
  %s2 = inlined_call_operand.vmem [shape: bf16[24,8], index: 2, kind: input, shape index: {}]
  %s3 = inlined_call_operand.vmem [shape: f32[1,8], index: 3, kind: input, shape index: {}]
  %s4 = inlined_call_operand.vmem [shape: bf16[8,8], index: 4, kind: input, shape index: {}]
  %s5 = inlined_call_operand.vmem [shape: f32[1,8], index: 5, kind: input, shape index: {}]
  %s6 = inlined_call_operand.vmem [shape: bf16[8,8], index: 6, kind: input, shape index: {}]
  %s7 = inlined_call_operand.vmem [shape: f32[1,8], index: 7, kind: input, shape index: {}]
  %s8 = inlined_call_operand.vmem [shape: f32[2,16,8], index: 8, kind: output, shape index: {}]
  %s9 = sld [smem:[#allocation0]]
  $region65: #{tpu_custom_call.1} parent=0
    _
  %s11 = ssub.s32 1, %s9
  %s12 = scalar_select 0, %s11, %s9
  loop: start=0, step=1, limit=4
  $region2: #{tpu_custom_call.1} parent=0 // loop_pre_header
    _
  $region3: #{tpu_custom_call.1} parent=0 // loop_header
    %s14 = sphi 0, %s18
    %p15 = scmp.ge.s32.totalorder %s14, 4
    %s21 = sphi 0, %s33
    %s22 = sphi 0, %s29
    %s23 = sphi 0, %s21
    %s24 = sphi 0, %s22
    %s25 = sphi 0, %s23
    %s26 = sphi 0, %s24
    %s38 = sphi 0, %s40
    %s41 = sphi 0, %s38
    %s42 = sphi 0, %s41
    %s58 = sphi 0, %s42
    %s66 = sphi 0, %s68
    %s69 = sphi 0, %s66
    %s70 = sphi 0, %s69
    %s86 = sphi 0, %s70
    %s90 = sphi 0, %s90
    %s92 = sphi 0, %s90
    %s93 = sphi 0, %s92
    %s107 = sphi 0, %s93
    %s111 = sphi 0, %s111
    %s113 = sphi 0, %s111
    %s114 = sphi 0, %s113
    %s128 = sphi 0, %s114
    %s132 = sphi 0, %s132
    %s134 = sphi 0, %s132
    %s135 = sphi 0, %s134
    %s149 = sphi 0, %s135
    %s153 = sphi 0, %s153
    %s155 = sphi 0, %s153
    %s156 = sphi 0, %s155
    %s170 = sphi 0, %s156
    %s174 = sphi 0, %s174
    %s176 = sphi 0, %s174
    %s177 = sphi 0, %s176
    %s191 = sphi 0, %s177
    %s195 = sphi 0, %s195
    %s197 = sphi 0, %s195
    %s198 = sphi 0, %s197
    %s212 = sphi 0, %s198
    %s220 = sphi 0, %s222
    %s223 = sphi 0, %s220
    %s224 = sphi 0, %s223
    %s240 = sphi 0, %s224
  $region4: #{tpu_custom_call.1} parent=0 // loop_header_branch
    %17 = sbr.rel (%p15) target = $region8
  $region5: #{tpu_custom_call.1} parent=0 // loop_body
    %s19 = ssub.s32 %s14, 1
    %s20 = ssub.s32 %s14, 2
    %s27 = sadd.s32 1, %s22
    %p28 = scmp.ge.s32.totalorder %s27, 1
    %s29 = scalar_select %p28, 0, %s27
    %s30 = sadd.s32 1, %s21
    %s31 = scalar_select %p28, %s30, %s21
    %p32 = scmp.ge.s32.totalorder %s31, 2
    %s33 = scalar_select %p32, 0, %s31
    %s34 = ssub.s32 %s21, %s33
    %s35 = ssub.s32 %s22, %s29
    %s36 = sor.u32 %s34, %s35
    %p37 = scmp.eq.s32.totalorder %s36, 0
    %s39 = sadd.s32 %s38, 1
    %s40 = scalar_select %p37, %s38, %s39
    %p43 = pneg %p37
    %p44 = scmp.eq.s32.totalorder %s14, 1
    %p45 = por %p43, %p44
    %p46 = scmp.ne.s32.totalorder %s38, %s41
    %p47 = scmp.eq.s32.totalorder %s14, 0
    %p48 = por %p46, %p47
    %p49 = scmp.ne.s32.totalorder %s38, %s41
    %p50 = scmp.eq.s32.totalorder %s19, 1
    %p51 = por %p49, %p50
    %p52 = scmp.ne.s32.totalorder %s41, %s42
    %p53 = scmp.eq.s32.totalorder %s19, 0
    %p54 = por %p52, %p53
    %p55 = scmp.ne.s32.totalorder %s41, %s42
    %p56 = scmp.eq.s32.totalorder %s20, 1
    %p57 = por %p55, %p56
    %p59 = scmp.ne.s32.totalorder %s42, %s58
    %p60 = scmp.eq.s32.totalorder %s20, 0
    %p61 = por %p59, %p60
    %s62 = ssub.s32 %s21, %s33
    %s63 = ssub.s32 %s22, %s29
    %s64 = sor.u32 %s62, %s63
    %p65 = scmp.eq.s32.totalorder %s64, 0
    %s67 = sadd.s32 %s66, 1
    %s68 = scalar_select %p65, %s66, %s67
    %p71 = pneg %p65
    %p72 = scmp.eq.s32.totalorder %s14, 1
    %p73 = por %p71, %p72
    %p74 = scmp.ne.s32.totalorder %s66, %s69
    %p75 = scmp.eq.s32.totalorder %s14, 0
    %p76 = por %p74, %p75
    %p77 = scmp.ne.s32.totalorder %s66, %s69
    %p78 = scmp.eq.s32.totalorder %s19, 1
    %p79 = por %p77, %p78
    %p80 = scmp.ne.s32.totalorder %s69, %s70
    %p81 = scmp.eq.s32.totalorder %s19, 0
    %p82 = por %p80, %p81
    %p83 = scmp.ne.s32.totalorder %s69, %s70
    %p84 = scmp.eq.s32.totalorder %s20, 1
    %p85 = por %p83, %p84
    %p87 = scmp.ne.s32.totalorder %s70, %s86
    %p88 = scmp.eq.s32.totalorder %s20, 0
    %p89 = por %p87, %p88
    %s91 = sadd.s32 %s90, 1
    %p94 = scmp.eq.s32.totalorder %s14, 1
    %p95 = scmp.ne.s32.totalorder %s90, %s92
    %p96 = scmp.eq.s32.totalorder %s14, 0
    %p97 = por %p95, %p96
    %p98 = scmp.ne.s32.totalorder %s90, %s92
    %p99 = scmp.eq.s32.totalorder %s19, 1
    %p100 = por %p98, %p99
    %p101 = scmp.ne.s32.totalorder %s92, %s93
    %p102 = scmp.eq.s32.totalorder %s19, 0
    %p103 = por %p101, %p102
    %p104 = scmp.ne.s32.totalorder %s92, %s93
    %p105 = scmp.eq.s32.totalorder %s20, 1
    %p106 = por %p104, %p105
    %p108 = scmp.ne.s32.totalorder %s93, %s107
    %p109 = scmp.eq.s32.totalorder %s20, 0
    %p110 = por %p108, %p109
    %s112 = sadd.s32 %s111, 1
    %p115 = scmp.eq.s32.totalorder %s14, 1
    %p116 = scmp.ne.s32.totalorder %s111, %s113
    %p117 = scmp.eq.s32.totalorder %s14, 0
    %p118 = por %p116, %p117
    %p119 = scmp.ne.s32.totalorder %s111, %s113
    %p120 = scmp.eq.s32.totalorder %s19, 1
    %p121 = por %p119, %p120
    %p122 = scmp.ne.s32.totalorder %s113, %s114
    %p123 = scmp.eq.s32.totalorder %s19, 0
    %p124 = por %p122, %p123
    %p125 = scmp.ne.s32.totalorder %s113, %s114
    %p126 = scmp.eq.s32.totalorder %s20, 1
    %p127 = por %p125, %p126
    %p129 = scmp.ne.s32.totalorder %s114, %s128
    %p130 = scmp.eq.s32.totalorder %s20, 0
    %p131 = por %p129, %p130
    %s133 = sadd.s32 %s132, 1
    %p136 = scmp.eq.s32.totalorder %s14, 1
    %p137 = scmp.ne.s32.totalorder %s132, %s134
    %p138 = scmp.eq.s32.totalorder %s14, 0
    %p139 = por %p137, %p138
    %p140 = scmp.ne.s32.totalorder %s132, %s134
    %p141 = scmp.eq.s32.totalorder %s19, 1
    %p142 = por %p140, %p141
    %p143 = scmp.ne.s32.totalorder %s134, %s135
    %p144 = scmp.eq.s32.totalorder %s19, 0
    %p145 = por %p143, %p144
    %p146 = scmp.ne.s32.totalorder %s134, %s135
    %p147 = scmp.eq.s32.totalorder %s20, 1
    %p148 = por %p146, %p147
    %p150 = scmp.ne.s32.totalorder %s135, %s149
    %p151 = scmp.eq.s32.totalorder %s20, 0
    %p152 = por %p150, %p151
    %s154 = sadd.s32 %s153, 1
    %p157 = scmp.eq.s32.totalorder %s14, 1
    %p158 = scmp.ne.s32.totalorder %s153, %s155
    %p159 = scmp.eq.s32.totalorder %s14, 0
    %p160 = por %p158, %p159
    %p161 = scmp.ne.s32.totalorder %s153, %s155
    %p162 = scmp.eq.s32.totalorder %s19, 1
    %p163 = por %p161, %p162
    %p164 = scmp.ne.s32.totalorder %s155, %s156
    %p165 = scmp.eq.s32.totalorder %s19, 0
    %p166 = por %p164, %p165
    %p167 = scmp.ne.s32.totalorder %s155, %s156
    %p168 = scmp.eq.s32.totalorder %s20, 1
    %p169 = por %p167, %p168
    %p171 = scmp.ne.s32.totalorder %s156, %s170
    %p172 = scmp.eq.s32.totalorder %s20, 0
    %p173 = por %p171, %p172
    %s175 = sadd.s32 %s174, 1
    %p178 = scmp.eq.s32.totalorder %s14, 1
    %p179 = scmp.ne.s32.totalorder %s174, %s176
    %p180 = scmp.eq.s32.totalorder %s14, 0
    %p181 = por %p179, %p180
    %p182 = scmp.ne.s32.totalorder %s174, %s176
    %p183 = scmp.eq.s32.totalorder %s19, 1
    %p184 = por %p182, %p183
    %p185 = scmp.ne.s32.totalorder %s176, %s177
    %p186 = scmp.eq.s32.totalorder %s19, 0
    %p187 = por %p185, %p186
    %p188 = scmp.ne.s32.totalorder %s176, %s177
    %p189 = scmp.eq.s32.totalorder %s20, 1
    %p190 = por %p188, %p189
    %p192 = scmp.ne.s32.totalorder %s177, %s191
    %p193 = scmp.eq.s32.totalorder %s20, 0
    %p194 = por %p192, %p193
    %s196 = sadd.s32 %s195, 1
    %p199 = scmp.eq.s32.totalorder %s14, 1
    %p200 = scmp.ne.s32.totalorder %s195, %s197
    %p201 = scmp.eq.s32.totalorder %s14, 0
    %p202 = por %p200, %p201
    %p203 = scmp.ne.s32.totalorder %s195, %s197
    %p204 = scmp.eq.s32.totalorder %s19, 1
    %p205 = por %p203, %p204
    %p206 = scmp.ne.s32.totalorder %s197, %s198
    %p207 = scmp.eq.s32.totalorder %s19, 0
    %p208 = por %p206, %p207
    %p209 = scmp.ne.s32.totalorder %s197, %s198
    %p210 = scmp.eq.s32.totalorder %s20, 1
    %p211 = por %p209, %p210
    %p213 = scmp.ne.s32.totalorder %s198, %s212
    %p214 = scmp.eq.s32.totalorder %s20, 0
    %p215 = por %p213, %p214
    %s216 = ssub.s32 %s21, %s33
    %s217 = ssub.s32 %s22, %s29
    %s218 = sor.u32 %s216, %s217
    %p219 = scmp.eq.s32.totalorder %s218, 0
    %s221 = sadd.s32 %s220, 1
    %s222 = scalar_select %p219, %s220, %s221
    %p225 = pneg %p219
    %p226 = scmp.eq.s32.totalorder %s14, 1
    %p227 = por %p225, %p226
    %p228 = scmp.ne.s32.totalorder %s220, %s223
    %p229 = scmp.eq.s32.totalorder %s14, 0
    %p230 = por %p228, %p229
    %p231 = scmp.ne.s32.totalorder %s220, %s223
    %p232 = scmp.eq.s32.totalorder %s19, 1
    %p233 = por %p231, %p232
    %p234 = scmp.ne.s32.totalorder %s223, %s224
    %p235 = scmp.eq.s32.totalorder %s19, 0
    %p236 = por %p234, %p235
    %p237 = scmp.ne.s32.totalorder %s223, %s224
    %p238 = scmp.eq.s32.totalorder %s20, 1
    %p239 = por %p237, %p238
    %p241 = scmp.ne.s32.totalorder %s224, %s240
    %p242 = scmp.eq.s32.totalorder %s20, 0
    %p243 = por %p241, %p242
    %p244 = scmp.le.s32.totalorder 1, %s14
    %p245 = scmp.lt.s32.totalorder %s14, 3
    %p246 = pnand %p244, %p245
    %p247 = pneg %p246
    // Predicated region
    $region9: #{tpu_custom_call.1} parent=5 // pred_check
      _
    $region10: #{tpu_custom_call.1} parent=5 // pred_check_branch
      %249 = sbr.rel (%p246) target = $region12
    $region11: #{tpu_custom_call.1} parent=5 // pred_region
      %s250 = ssub.s32 %s14, 1
      // Predicated region
      $region13: #{tpu_custom_call.1} parent=11 // pred_check
        %p251 = pneg %p103
      $region14: #{tpu_custom_call.1} parent=11 // pred_check_branch
        %253 = sbr.rel (%p251) target = $region16
      $region15: #{tpu_custom_call.1} parent=11 // pred_region
        _
      $region16: #{tpu_custom_call.1} parent=11 // pred_fallthru
        _
      // Predicated region
      $region17: #{tpu_custom_call.1} parent=11 // pred_check
        %p254 = pneg %p124
      $region18: #{tpu_custom_call.1} parent=11 // pred_check_branch
        %256 = sbr.rel (%p254) target = $region20
      $region19: #{tpu_custom_call.1} parent=11 // pred_region
        _
      $region20: #{tpu_custom_call.1} parent=11 // pred_fallthru
        _
      // Predicated region
      $region21: #{tpu_custom_call.1} parent=11 // pred_check
        %p257 = pneg %p145
      $region22: #{tpu_custom_call.1} parent=11 // pred_check_branch
        %259 = sbr.rel (%p257) target = $region24
      $region23: #{tpu_custom_call.1} parent=11 // pred_region
        _
      $region24: #{tpu_custom_call.1} parent=11 // pred_fallthru
        _
      // Predicated region
      $region25: #{tpu_custom_call.1} parent=11 // pred_check
        %p260 = pneg %p166
      $region26: #{tpu_custom_call.1} parent=11 // pred_check_branch
        %262 = sbr.rel (%p260) target = $region28
      $region27: #{tpu_custom_call.1} parent=11 // pred_region
        _
      $region28: #{tpu_custom_call.1} parent=11 // pred_fallthru
        _
      // Predicated region
      $region29: #{tpu_custom_call.1} parent=11 // pred_check
        %p263 = pneg %p187
      $region30: #{tpu_custom_call.1} parent=11 // pred_check_branch
        %265 = sbr.rel (%p263) target = $region32
      $region31: #{tpu_custom_call.1} parent=11 // pred_region
        _
      $region32: #{tpu_custom_call.1} parent=11 // pred_fallthru
        _
      // Predicated region
      $region33: #{tpu_custom_call.1} parent=11 // pred_check
        %p266 = pneg %p208
      $region34: #{tpu_custom_call.1} parent=11 // pred_check_branch
        %268 = sbr.rel (%p266) target = $region36
      $region35: #{tpu_custom_call.1} parent=11 // pred_region
        _
      $region36: #{tpu_custom_call.1} parent=11 // pred_fallthru
        _
    $region12: #{tpu_custom_call.1} parent=5 // pred_fallthru
      _
    %p269 = scmp.lt.s32.totalorder %s14, 2
    // Predicated region
    $region37: #{tpu_custom_call.1} parent=5 // pred_check
      %p270 = pneg %p269
    $region38: #{tpu_custom_call.1} parent=5 // pred_check_branch
      %272 = sbr.rel (%p270) target = $region40
    $region39: #{tpu_custom_call.1} parent=5 // pred_region
      // Predicated region
      $region41: #{tpu_custom_call.1} parent=39 // pred_check
        %p273 = pneg %p48
      $region42: #{tpu_custom_call.1} parent=39 // pred_check_branch
        %275 = sbr.rel (%p273) target = $region44
      $region43: #{tpu_custom_call.1} parent=39 // pred_region
        %s276 = smul.u32 2, %s22
        %s277 = ssub.s32 3, %s276
        %p278 = scmp.lt.s32.totalorder %s277, 2
        %s279 = scalar_select %p278, %s277, 2
        %s280 = smul.u32 128, %s279
        %p281 = scmp.lt.s32.totalorder %s21, 1
        %s282 = scalar_select %p281, %s21, 1
        %p283 = scmp.lt.s32.totalorder %s276, 2
        %s284 = scalar_select %p283, %s276, 2
        %s285 = smul.addr %s282, 3
        %s286 = sadd.s32 %s284, %s285
        %s287 = smul.addr %s286, 8
        %s288 = scalar_lea.vmem %s0, %s287
        %s289 = smul.u32 2, %s22
        %s290 = ssub.s32 3, %s289
        %p291 = scmp.lt.s32.totalorder %s290, 2
        %s292 = scalar_select %p291, %s290, 2
        %s293 = smul.u32 128, %s292
      $region44: #{tpu_custom_call.1} parent=39 // pred_fallthru
        _
      // Predicated region
      $region45: #{tpu_custom_call.1} parent=39 // pred_check
        %p294 = pneg %p76
      $region46: #{tpu_custom_call.1} parent=39 // pred_check_branch
        %296 = sbr.rel (%p294) target = $region48
      $region47: #{tpu_custom_call.1} parent=39 // pred_region
        %p297 = scmp.lt.s32.totalorder %s21, 1
        %s298 = scalar_select %p297, %s21, 1
        %p299 = scmp.lt.s32.totalorder %s22, 0
        %s300 = scalar_select %p299, %s22, 0
        %s301 = sadd.s32 %s300, %s298
        %s302 = smul.addr %s301, 4
        %s303 = scalar_lea.vmem %s1, %s302
      $region48: #{tpu_custom_call.1} parent=39 // pred_fallthru
        _
    $region40: #{tpu_custom_call.1} parent=5 // pred_fallthru
      _
    %p304 = scmp.le.s32.totalorder 1, %s14
    %p305 = scmp.lt.s32.totalorder %s14, 3
    %p306 = pnand %p304, %p305
    %p307 = pneg %p306
    // Predicated region
    $region49: #{tpu_custom_call.1} parent=5 // pred_check
      _
    $region50: #{tpu_custom_call.1} parent=5 // pred_check_branch
      %309 = sbr.rel (%p306) target = $region52
    $region51: #{tpu_custom_call.1} parent=5 // pred_region
      %s310 = ssub.s32 %s14, 1
      %s311 = smul.u32 2, %s24
      %s312 = ssub.s32 3, %s311
      %p313 = scmp.lt.s32.totalorder %s312, 2
      %s314 = scalar_select %p313, %s312, 2
      %s315 = smul.u32 128, %s314
      %p316 = scmp.lt.s32.totalorder %s23, 1
      %s317 = scalar_select %p316, %s23, 1
      %p318 = scmp.lt.s32.totalorder %s311, 2
      %s319 = scalar_select %p318, %s311, 2
      %s320 = smul.addr %s317, 3
      %s321 = sadd.s32 %s319, %s320
      %s322 = smul.addr %s321, 8
      %s323 = scalar_lea.vmem %s0, %s322
      %p324 = pneg %p54
      %p325 = pneg %p51
      %p326 = scmp.lt.s32.totalorder %s23, 1
      %s327 = scalar_select %p326, %s23, 1
      %p328 = scmp.lt.s32.totalorder %s24, 0
      %s329 = scalar_select %p328, %s24, 0
      %s330 = sadd.s32 %s329, %s327
      %s331 = smul.addr %s330, 4
      %s332 = scalar_lea.vmem %s1, %s331
      %p333 = pneg %p82
      %p334 = pneg %p79
      %p335 = pneg %p103
      %p336 = pneg %p100
      %p337 = pneg %p124
      %p338 = pneg %p121
      %p339 = pneg %p145
      %p340 = pneg %p142
      %p341 = pneg %p166
      %p342 = pneg %p163
      %p343 = pneg %p187
      %p344 = pneg %p184
      %p345 = pneg %p208
      %p346 = pneg %p205
      %p347 = pneg %p236
      %p348 = pneg %p233
      %s349 = smul.u32 2, %s24
      %p350 = scmp.lt.s32.totalorder %s23, 1
      %s351 = scalar_select %p350, %s23, 1
      %p352 = scmp.lt.s32.totalorder %s349, 1
      %s353 = scalar_select %p352, %s349, 1
      %s354 = smul.addr %s351, 2
      %s355 = sadd.s32 %s353, %s354
      %s356 = smul.addr %s355, 8
      %s357 = scalar_lea.vmem %s8, %s356
      %s358 = smul.u32 2, %s24
      %s359 = ssub.s32 3, %s358
      %p360 = scmp.lt.s32.totalorder %s359, 2
      %s361 = scalar_select %p360, %s359, 2
      %s362 = smul.u32 128, %s361
      %p363 = scmp.lt.s32.totalorder %s23, 1
      %s364 = scalar_select %p363, %s23, 1
      %p365 = scmp.lt.s32.totalorder %s358, 2
      %s366 = scalar_select %p365, %s358, 2
      %s367 = smul.addr %s364, 3
      %s368 = sadd.s32 %s366, %s367
      %s369 = smul.addr %s368, 8
      %s370 = scalar_lea.vmem %s0, %s369
      %s371 = smul.u32 2, %s24
      %s372 = ssub.s32 3, %s371
      %p373 = scmp.lt.s32.totalorder %s372, 2
      %s374 = scalar_select %p373, %s372, 2
      %s375 = smul.u32 128, %s374
      %p376 = scmp.lt.s32.totalorder %s23, 1
      %s377 = scalar_select %p376, %s23, 1
      %p378 = scmp.lt.s32.totalorder %s24, 0
      %s379 = scalar_select %p378, %s24, 0
      %s380 = sadd.s32 %s379, %s377
      %s381 = smul.addr %s380, 4
      %s382 = scalar_lea.vmem %s1, %s381
      %s383 = smul.u32 2, %s24
      %p384 = scmp.lt.s32.totalorder %s23, 1
      %s385 = scalar_select %p384, %s23, 1
      %p386 = scmp.lt.s32.totalorder %s383, 1
      %s387 = scalar_select %p386, %s383, 1
      %s388 = smul.addr %s385, 2
      %s389 = sadd.s32 %s387, %s388
      %s390 = smul.addr %s389, 8
      %s391 = scalar_lea.vmem %s8, %s390
      %s392 = smul.u32 2, %s24
      %v394 = vld [vmem:[%s370] sm:$0xff]
      %v395 = vld [vmem:[%s370 + $0x8] sm:$0xff]
      %v396 = vld [vmem:[%s382] sm:$0xf]
      %vm397 = vcmp.gt.f32.partialorder %v394, 0.0
      %vm398 = vcmp.gt.f32.partialorder %v395, 0.0
      %vm399 = vcmp.gt.f32.partialorder %v396, 0.0
      %v400 = vmul.f32 %v394, 0.2
      %v401 = vmul.f32 %v395, 0.2
      %v402 = vmul.f32 %v396, 0.2
      %v403 = vsel %vm397, %v394, %v400
      %v404 = vsel %vm398, %v395, %v401
      %v405 = vsel %vm399, %v396, %v402
      %v406 = vpack.c.bf16 %v404, %v403
      %v407 = vpack.c.bf16 %v405, %v405
      %vm410 = vcmask 1046528
      %v411 = vrot.slane %v406, 1
      %v412 = vrot.slane %v407, 1
      %v413 = vsel %vm410, %v411, %v412
      %414 = vrot.lane.b32.xlu0 %v413, 8
      %v415 = vpop.permute.xlu0 %414
      %vm416 = vcmask 1045504
      %v417 = vrot.slane %v406, 2
      %v418 = vrot.slane %v407, 2
      %v419 = vsel %vm416, %v417, %v418
      %420 = vrot.lane.b32.xlu0 %v419, 16
      %v421 = vpop.permute.xlu0 %420
      %vm422 = vcmask 64512
      %v425 = vsel %vm422, %v406, %v415
      %vm426 = vcmask 130048
      %v428 = vsel %vm426, %v425, %v421
      %v429 = vld [vmem:[%s2] sm:$0xf]
      %v430 = vld [vmem:[%s2 + $0x4] sm:$0xf]
      %v431 = vld [vmem:[%s2 + $0x8] sm:$0xf]
      %v432 = vld [vmem:[%s3] sm:$0x1]
      %v434 = vlaneseq
      %v435 = vshrl.u32 %v434, 7
      %v436 = vsub.s32 0, %v435
      %v437 = vrot.slane %v432, %v436
      %v442 = vunpack.c.l.b16 %v429
      %v443 = vunpack.c.l.b16 %v430
      %v444 = vunpack.c.l.b16 %v431
      %v445 = vpack.c.b16 %v443, %v442
      %v446 = vpack.c.b16 %v444, %v444
      %vm448 = vcmask 195584
      %v449 = vsel %vm448, %v428, 0
      %vm451 = vcmask 1043456
      %v453 = vsel %vm451, %v446, 0
      %455 = vmatprep.subr.bf16.mxu0 0
      %456 = vmatpush1.bf16.msra.mxu0 0
      %457 = vmatprep.subr.bf16.mxu0 0
      %458 = vmatpush1.bf16.msra.mxu0 0
      %459 = vmatprep.subr.bf16.mxu0 0
      %460 = vmatpush1.bf16.msra.mxu0 0
      %461 = vmatprep.subr.bf16.mxu0 0
      %462 = vmatpush1.bf16.msra.mxu0 0
      %463 = vmatprep.subr.bf16.mxu0 0
      %464 = vmatpush1.bf16.msra.mxu0 0
      %465 = vmatprep.subr.bf16.mxu0 0
      %466 = vmatpush1.bf16.msra.mxu0 0
      %467 = vmatprep.subr.bf16.mxu0 0
      %468 = vmatpush1.bf16.msra.mxu0 %v453
      %469 = vmatprep.subr.bf16.mxu0 0
      %470 = vmatpush1.bf16.msra.mxu0 %v445
      %471 = vmatprep.subr.bf16.mxu0 0
      %472 = vmatpush2.bf16.msra.mxu0 0
      %473 = vmatprep.subr.bf16.mxu0 0
      %474 = vmatpush2.bf16.msra.mxu0 0
      %475 = vmatprep.subr.bf16.mxu0 0
      %476 = vmatpush2.bf16.msra.mxu0 0
      %477 = vmatprep.subr.bf16.mxu0 0
      %478 = vmatpush2.bf16.msra.mxu0 0
      %479 = vmatprep.subr.bf16.mxu0 0
      %480 = vmatpush2.bf16.msra.mxu0 0
      %481 = vmatprep.subr.bf16.mxu0 0
      %482 = vmatpush2.bf16.msra.mxu0 0
      %483 = vmatprep.subr.bf16.mxu0 0
      %484 = vmatpush2.bf16.msra.mxu0 0
      %485 = vmatprep.subr.bf16.mxu0 0
      %486 = vmatpush2.bf16.msra.mxu0 0
      %487 = vmatprep.mubr.bf16.mxu0 0
      %488 = vmatmul.mubr.bf16.gmra.mxu0 %v449
      %v489 = vpop.f32.mrf.mxu0
      %v490 = vadd.f32 %v437, %v489
      %v491 = vpop.f32.mrf.mxu0
      %v492 = vpop.f32.mrf.mxu0
      %v493 = vadd.f32 %v437, %v492
      %v494 = vpop.f32.mrf.mxu0
      %495 = vdwg.mxu0
      %vm496 = vcmp.gt.f32.partialorder %v490, 0.0
      %vm497 = vcmp.gt.f32.partialorder %v493, 0.0
      %v498 = vmul.f32 %v490, 0.2
      %v499 = vmul.f32 %v493, 0.2
      %v500 = vsel %vm496, %v490, %v498
      %v501 = vsel %vm497, %v493, %v499
      %v502 = vpack.c.bf16 %v501, %v500
      %v503 = vld [vmem:[%s4] sm:$0xf]
      %v504 = vld [vmem:[%s5] sm:$0x1]
      %v506 = vlaneseq
      %v507 = vshrl.u32 %v506, 7
      %v508 = vsub.s32 0, %v507
      %v509 = vrot.slane %v504, %v508
      %v512 = vsel %vm422, %v502, 0
      %v515 = vsel %vm451, %v503, 0
      %517 = vmatprep.subr.bf16.mxu0 0
      %518 = vmatpush1.bf16.msra.mxu0 0
      %519 = vmatprep.subr.bf16.mxu0 0
      %520 = vmatpush1.bf16.msra.mxu0 0
      %521 = vmatprep.subr.bf16.mxu0 0
      %522 = vmatpush1.bf16.msra.mxu0 0
      %523 = vmatprep.subr.bf16.mxu0 0
      %524 = vmatpush1.bf16.msra.mxu0 0
      %525 = vmatprep.subr.bf16.mxu0 0
      %526 = vmatpush1.bf16.msra.mxu0 0
      %527 = vmatprep.subr.bf16.mxu0 0
      %528 = vmatpush1.bf16.msra.mxu0 0
      %529 = vmatprep.subr.bf16.mxu0 0
      %530 = vmatpush1.bf16.msra.mxu0 0
      %531 = vmatprep.subr.bf16.mxu0 0
      %532 = vmatpush1.bf16.msra.mxu0 %v515
      %533 = vmatprep.subr.bf16.mxu0 0
      %534 = vmatpush2.bf16.msra.mxu0 0
      %535 = vmatprep.subr.bf16.mxu0 0
      %536 = vmatpush2.bf16.msra.mxu0 0
      %537 = vmatprep.subr.bf16.mxu0 0
      %538 = vmatpush2.bf16.msra.mxu0 0
      %539 = vmatprep.subr.bf16.mxu0 0
      %540 = vmatpush2.bf16.msra.mxu0 0
      %541 = vmatprep.subr.bf16.mxu0 0
      %542 = vmatpush2.bf16.msra.mxu0 0
      %543 = vmatprep.subr.bf16.mxu0 0
      %544 = vmatpush2.bf16.msra.mxu0 0
      %545 = vmatprep.subr.bf16.mxu0 0
      %546 = vmatpush2.bf16.msra.mxu0 0
      %547 = vmatprep.subr.bf16.mxu0 0
      %548 = vmatpush2.bf16.msra.mxu0 0
      %549 = vmatprep.mubr.bf16.mxu0 0
      %550 = vmatmul.mubr.bf16.gmra.mxu0 %v512
      %v551 = vpop.f32.mrf.mxu0
      %v552 = vadd.f32 %v509, %v551
      %v553 = vpop.f32.mrf.mxu0
      %v554 = vpop.f32.mrf.mxu0
      %v555 = vadd.f32 %v509, %v554
      %v556 = vpop.f32.mrf.mxu0
      %557 = vdwg.mxu0
      %v558 = vpack.c.bf16 %v395, %v394
      %v559 = vpack.c.bf16 %v396, %v396
      %v560 = vld [vmem:[%s6] sm:$0xf]
      %v561 = vld [vmem:[%s7] sm:$0x1]
      %v563 = vlaneseq
      %v564 = vshrl.u32 %v563, 7
      %v565 = vsub.s32 0, %v564
      %v566 = vrot.slane %v561, %v565
      %v570 = vrot.slane %v558, 1
      %v571 = vrot.slane %v559, 1
      %v572 = vsel %vm410, %v570, %v571
      %v574 = vsel %vm422, %v572, 0
      %v577 = vsel %vm451, %v560, 0
      %579 = vmatprep.subr.bf16.mxu0 0
      %580 = vmatpush1.bf16.msra.mxu0 0
      %581 = vmatprep.subr.bf16.mxu0 0
      %582 = vmatpush1.bf16.msra.mxu0 0
      %583 = vmatprep.subr.bf16.mxu0 0
      %584 = vmatpush1.bf16.msra.mxu0 0
      %585 = vmatprep.subr.bf16.mxu0 0
      %586 = vmatpush1.bf16.msra.mxu0 0
      %587 = vmatprep.subr.bf16.mxu0 0
      %588 = vmatpush1.bf16.msra.mxu0 0
      %589 = vmatprep.subr.bf16.mxu0 0
      %590 = vmatpush1.bf16.msra.mxu0 0
      %591 = vmatprep.subr.bf16.mxu0 0
      %592 = vmatpush1.bf16.msra.mxu0 0
      %593 = vmatprep.subr.bf16.mxu0 0
      %594 = vmatpush1.bf16.msra.mxu0 %v577
      %595 = vmatprep.subr.bf16.mxu0 0
      %596 = vmatpush2.bf16.msra.mxu0 0
      %597 = vmatprep.subr.bf16.mxu0 0
      %598 = vmatpush2.bf16.msra.mxu0 0
      %599 = vmatprep.subr.bf16.mxu0 0
      %600 = vmatpush2.bf16.msra.mxu0 0
      %601 = vmatprep.subr.bf16.mxu0 0
      %602 = vmatpush2.bf16.msra.mxu0 0
      %603 = vmatprep.subr.bf16.mxu0 0
      %604 = vmatpush2.bf16.msra.mxu0 0
      %605 = vmatprep.subr.bf16.mxu0 0
      %606 = vmatpush2.bf16.msra.mxu0 0
      %607 = vmatprep.subr.bf16.mxu0 0
      %608 = vmatpush2.bf16.msra.mxu0 0
      %609 = vmatprep.subr.bf16.mxu0 0
      %610 = vmatpush2.bf16.msra.mxu0 0
      %611 = vmatprep.mubr.bf16.mxu0 0
      %612 = vmatmul.mubr.bf16.gmra.mxu0 %v574
      %v613 = vpop.f32.mrf.mxu0
      %v614 = vadd.f32 %v566, %v613
      %v615 = vpop.f32.mrf.mxu0
      %v616 = vpop.f32.mrf.mxu0
      %v617 = vadd.f32 %v566, %v616
      %v618 = vpop.f32.mrf.mxu0
      %619 = vdwg.mxu0
      %v620 = vadd.f32 %v614, %v552
      %v621 = vadd.f32 %v617, %v555
      %622 = vst.msk [vmem:[%s391] sm:$0xff] %vm422, %v620
      %623 = vst.msk [vmem:[%s391 + $0x8] sm:$0xff] %vm422, %v621
      %s624 = smul.u32 2, %s24
      %p625 = scmp.lt.s32.totalorder %s23, 1
      %s626 = scalar_select %p625, %s23, 1
      %p627 = scmp.lt.s32.totalorder %s624, 1
      %s628 = scalar_select %p627, %s624, 1
      %s629 = smul.addr %s626, 2
      %s630 = sadd.s32 %s628, %s629
      %s631 = smul.addr %s630, 8
      %s632 = scalar_lea.vmem %s8, %s631
      // Predicated region
      $region53: #{tpu_custom_call.1} parent=51 // pred_check
        %p633 = pneg %p233
      $region54: #{tpu_custom_call.1} parent=51 // pred_check_branch
        %635 = sbr.rel (%p633) target = $region56
      $region55: #{tpu_custom_call.1} parent=51 // pred_region
        %s636 = smul.u32 2, %s24
      $region56: #{tpu_custom_call.1} parent=51 // pred_fallthru
        _
    $region52: #{tpu_custom_call.1} parent=5 // pred_fallthru
      _
    %p637 = scmp.le.s32.totalorder 2, %s14
    // Predicated region
    $region57: #{tpu_custom_call.1} parent=5 // pred_check
      %p638 = pneg %p637
    $region58: #{tpu_custom_call.1} parent=5 // pred_check_branch
      %640 = sbr.rel (%p638) target = $region60
    $region59: #{tpu_custom_call.1} parent=5 // pred_region
      %s641 = ssub.s32 %s14, 2
      // Predicated region
      $region61: #{tpu_custom_call.1} parent=59 // pred_check
        %p642 = pneg %p239
      $region62: #{tpu_custom_call.1} parent=59 // pred_check_branch
        %644 = sbr.rel (%p642) target = $region64
      $region63: #{tpu_custom_call.1} parent=59 // pred_region
        %s645 = smul.u32 2, %s26
        %p646 = scmp.lt.s32.totalorder %s25, 1
        %s647 = scalar_select %p646, %s25, 1
        %p648 = scmp.lt.s32.totalorder %s645, 1
        %s649 = scalar_select %p648, %s645, 1
        %s650 = smul.addr %s647, 2
        %s651 = sadd.s32 %s649, %s650
        %s652 = smul.addr %s651, 8
        %s653 = scalar_lea.vmem %s8, %s652
      $region64: #{tpu_custom_call.1} parent=59 // pred_fallthru
        _
    $region60: #{tpu_custom_call.1} parent=5 // pred_fallthru
      _
  $region6: #{tpu_custom_call.1} parent=0 // loop_footer
    %s18 = sadd.s32 1, %s14
  $region7: #{tpu_custom_call.1} parent=0 // loop_footer_branch
    %13 = sbr.rel target = $region3
  $region8: #{tpu_custom_call.1} parent=0 // loop_exit
    _

</llo_original>
